<compile_context>
chip_gen: v6e
topology: v6e:2x2x1
jax: 0.10.0
libtpu: 0.0.40
codegen_flags: <defaults>
</compile_context>

<pallas_src>
import functools
import math

import numpy as np
import jax
import jax.numpy as jnp
from jax import lax
from jax.experimental import pallas as pl
from jax.experimental.pallas import tpu as pltpu


def _build_pe_table(d_model: int, max_len: int = 5000) -> jnp.ndarray:
    """Deterministic parameter setup (mirrors the PyTorch __init__)."""
    assert d_model % 2 == 0, "d_model must be even (same assumption as the PyTorch module)"
    position = jnp.arange(0, max_len, dtype=jnp.float32)[:, None]            # (L, 1)
    div_term = jnp.exp(
        jnp.arange(0, d_model, 2, dtype=jnp.float32) * (-np.log(10000.0) / d_model)
    )                                                                         # (D/2,)
    pe = jnp.zeros((max_len, d_model), dtype=jnp.float32)
    pe = pe.at[:, 0::2].set(jnp.sin(position * div_term))
    pe = pe.at[:, 1::2].set(jnp.cos(position * div_term))
    # unsqueeze(0).transpose(0, 1) -> (max_len, 1, d_model)
    return pe[:, None, :]


def _pos_enc_kernel(x_ref, pe_ref, o_ref, *, d_model: int, batches_per_block: int,
                    unroll_limit: int = 16):
    # x_ref / o_ref: (ts, bg*D) in x.dtype;  pe_ref: (ts, D) in f32.
    pe_row = pe_ref[...]                                       # f32, loaded once

    def add_one(start):
        sl = pl.ds(start, d_model)
        o_ref[:, sl] = (x_ref[:, sl].astype(jnp.float32) + pe_row).astype(o_ref.dtype)

    if batches_per_block <= unroll_limit:
        # Static ref slices: zero-cost views, no block-sized temporary.
        for b in range(batches_per_block):
            add_one(b * d_model)
    else:
        def body(b, carry):
            start = b * d_model
            if d_model % 128 == 0:
                start = pl.multiple_of(start, 128)
            add_one(start)
            return carry
        lax.fori_loop(0, batches_per_block, body, 0)


def positional_encoding(
    x: jnp.ndarray,
    pe_full: jnp.ndarray,
    *,
    min_bytes_for_kernel: int = 1 << 20,
    block_bytes: int = 2 << 20,
) -> jnp.ndarray:
    """x: (S, B, D); pe_full: (max_len, 1, D) f32. Returns x + pe[:S] (dtype of x)."""
    S, B, D = x.shape
    pe = pe_full[:S, 0, :]                                    # (S, D), keep f32 (fp32 add)

    itemsize = jnp.dtype(x.dtype).itemsize
    # Tiny inputs: launch + per-step overhead dwarfs the work; let XLA fuse.
    if x.size * itemsize < min_bytes_for_kernel:
        return (x.astype(jnp.float32) + pe[:, None, :]).astype(x.dtype)

    x2 = x.reshape(S, B * D)                                  # free row-major view (lane-dense)

    sub = 8 * (4 // itemsize)                                 # sublane multiple: f32 8, bf16 16, i8 32
    row_bytes = B * D * itemsize

    if row_bytes <= block_bytes:
        bg = B                                                # full lane width per block
        ts = max(1, block_bytes // row_bytes)
        ts = max(sub, (ts // sub) * sub)
        # Keep >= ~4 sequence steps when S allows (megacore sharding + DMA overlap).
        quarter = (pl.cdiv(S, 4) // sub) * sub
        if quarter >= sub:
            ts = min(ts, quarter)
        ts = min(ts, S)
    else:
        # Very wide rows: tile the flattened lane axis by whole batch groups.
        ts = min(S, sub)
        bg = max(1, block_bytes // (ts * D * itemsize))
        if D % 128 != 0:
            m = 128 // math.gcd(D, 128)                       # keep bg*D lane-aligned
            bg = max(m, (bg // m) * m)
        bg = min(bg, B)

    # Batch groups innermost: pe's block index is constant across that axis,
    # so its DMA is skipped on revisits.
    grid = (pl.cdiv(S, ts), pl.cdiv(B, bg))

    out2 = pl.pallas_call(
        functools.partial(_pos_enc_kernel, d_model=D, batches_per_block=bg),
        out_shape=jax.ShapeDtypeStruct((S, B * D), x.dtype),
        grid=grid,
        in_specs=[
            pl.BlockSpec((ts, bg * D), lambda i, j: (i, j)),  # x  (lane-dense)
            pl.BlockSpec((ts, D), lambda i, j: (i, 0)),       # pe (f32, un-broadcast)
        ],
        out_specs=pl.BlockSpec((ts, bg * D), lambda i, j: (i, j)),
        compiler_params=pltpu.CompilerParams(
            dimension_semantics=("parallel", "parallel"),
        ),
    )(x2, pe)

    return out2.reshape(S, B, D)


if __name__ == "__main__":
    S, B, D = 8, 2, 32  # seq=8, batch=2, d_model=32
    key = jax.random.PRNGKey(0)
    x = jax.random.normal(key, (S, B, D), dtype=jnp.float32)

    pe_full = _build_pe_table(d_model=D, max_len=5000)

    # Force the Pallas path even at this tiny demo size (normally the wrapper
    # would fall back to the fused XLA add below ~1 MiB).
    out = positional_encoding(x, pe_full, min_bytes_for_kernel=0)
    out = jax.block_until_ready(out)

    # Reference check (plain JAX, matches the PyTorch forward: x + pe[:S])
    ref = x + pe_full[:S]
    np.testing.assert_allclose(np.asarray(out), np.asarray(ref), rtol=1e-6, atol=1e-6)

    print("KERNEL_OK")
</pallas_src>

<mosaic_0001>
module attributes {stable_mosaic.version = 11 : i64} {
  func.func @_pos_enc_kernel(%arg0: i32, %arg1: i32, %arg2: memref<8x64xf32, #tpu.memory_space<vmem>>, %arg3: memref<8x32xf32, #tpu.memory_space<vmem>>, %arg4: memref<8x64xf32, #tpu.memory_space<vmem>>) attributes {dimension_semantics = [#tpu.dimension_semantics<parallel>, #tpu.dimension_semantics<parallel>], iteration_bounds = array<i64: 1, 1>, scalar_prefetch = 0 : i64, scratch_operands = 0 : i64, tpu.core_type = #tpu.core_type<tc>, window_params = [{transform_indices = @transform_0, window_bounds = array<i64: 8, 64>}, {transform_indices = @transform_1, window_bounds = array<i64: 8, 32>}, {transform_indices = @transform_2, window_bounds = array<i64: 8, 64>}]} {
    %c0 = arith.constant 0 : index
    %c0_0 = arith.constant 0 : index
    %0 = vector.load %arg3[%c0, %c0_0] : memref<8x32xf32, #tpu.memory_space<vmem>>, vector<8x32xf32>
    %c0_1 = arith.constant 0 : index
    %c0_2 = arith.constant 0 : index
    %1 = vector.load %arg2[%c0_1, %c0_2] : memref<8x64xf32, #tpu.memory_space<vmem>>, vector<8x32xf32>
    %2 = arith.addf %1, %0 : vector<8x32xf32>
    %c0_3 = arith.constant 0 : index
    %c0_4 = arith.constant 0 : index
    %3 = vector.load %arg4[%c0_3, %c0_4] : memref<8x64xf32, #tpu.memory_space<vmem>>, vector<8x32xf32>
    tpu.vector_store %arg4[%c0_3, %c0_4], %2 {strides = array<i32>} : memref<8x64xf32, #tpu.memory_space<vmem>>, vector<8x32xf32>,
    %c0_5 = arith.constant 0 : index
    %c32 = arith.constant 32 : index
    %4 = vector.load %arg2[%c0_5, %c32] : memref<8x64xf32, #tpu.memory_space<vmem>>, vector<8x32xf32>
    %5 = arith.addf %4, %0 : vector<8x32xf32>
    %c0_6 = arith.constant 0 : index
    %c32_7 = arith.constant 32 : index
    %6 = vector.load %arg4[%c0_6, %c32_7] : memref<8x64xf32, #tpu.memory_space<vmem>>, vector<8x32xf32>
    tpu.vector_store %arg4[%c0_6, %c32_7], %5 {strides = array<i32>} : memref<8x64xf32, #tpu.memory_space<vmem>>, vector<8x32xf32>,
    return
  }
  func.func @transform_0(%arg0: i32, %arg1: i32) -> (i32, i32) {
    %c0_i32 = arith.constant 0 : i32
    return %arg0, %arg1 : i32, i32
  }
  func.func @transform_1(%arg0: i32, %arg1: i32) -> (i32, i32) {
    %c0_i32 = arith.constant 0 : i32
    %c0_i32_0 = arith.constant 0 : i32
    return %arg0, %c0_i32 : i32, i32
  }
  func.func @transform_2(%arg0: i32, %arg1: i32) -> (i32, i32) {
    %c0_i32 = arith.constant 0 : i32
    return %arg0, %arg1 : i32, i32
  }
}

</mosaic_0001>

<llo_original>
// kernel: tpu_custom_call.1
$region0: #{tpu_custom_call.1}
  #allocation0 [shape = 'u32[]', space=smem, size = 0x4, offset = 0x4, fixed_abs, tag = 'smem constant byte address 0x4 - core index']
  #allocation1 [shape = 'u32[144,128]{1,0:T(1,128)}', space=vmem, size = 0x12000, scoped, tag = 'internal scratch']
  %s0 = inlined_call_operand.hbm [shape: f32[8,64], index: 0, kind: input, shape index: {}]
  %s1 = inlined_call_operand.hbm [shape: f32[8,32], index: 1, kind: input, shape index: {}]
  %s2 = inlined_call_operand.hbm [shape: f32[8,64], index: 2, kind: output, shape index: {}]
  %s3 = sld [smem:[#allocation0]]
  $region26: #{tpu_custom_call.1} parent=0
    _
  %s5 = ssub.s32 1, %s3
  %s6 = scalar_select 0, %s5, %s3
  $region1: #{tpu_custom_call.1} parent=0
    #allocation2 [shape = 'u8[4096]{0}', space=vmem, size = 0x1000, scoped, tag = 'input window, operand 0, single buffered']
    #allocation3 [shape = 's32[1]{0}', space=sflag, size = 0x4, scoped, tag = 'scoped memory for tpu_custom_call.1']
    #allocation4 [shape = 's32[1]{0}', space=sflag, size = 0x4, scoped, tag = 'scoped memory for tpu_custom_call.1']
    #allocation5 [shape = 'u8[4096]{0}', space=vmem, size = 0x1000, scoped, tag = 'input window, operand 1, single buffered']
    #allocation6 [shape = 's32[1]{0}', space=sflag, size = 0x4, scoped, tag = 'scoped memory for tpu_custom_call.1']
    #allocation7 [shape = 'u8[4096]{0}', space=vmem, size = 0x1000, scoped, tag = 'output window, operand 0, single buffered']
    %7 = vsyncpa [#allocation3], 0
    %8 = vsyncpa [#allocation6], 0
    %9 = vsyncpa [#allocation4], 0
    // Predicated region
    $region2: #{tpu_custom_call.1} parent=1 // pred_check
      _
    $region3: #{tpu_custom_call.1} parent=1 // pred_check_branch
      %11 = sbr.rel (0) target = $region5
    $region4: #{tpu_custom_call.1} parent=1 // pred_region
      %s13 = ssub.s32 128, 128
      %14 = vsyncadd [#allocation3], %s13
      %s16 = sshll.u32 [#allocation2], 4
      %s17 = int_to_ptr.vmem [resolvable:$true] %s16
      %19 = dma.hbm_to_vmem [thread:$0]  %s0, 128, %s17, [#allocation3]
    $region5: #{tpu_custom_call.1} parent=1 // pred_fallthru
      _
    // Predicated region
    $region6: #{tpu_custom_call.1} parent=1 // pred_check
      _
    $region7: #{tpu_custom_call.1} parent=1 // pred_check_branch
      %21 = sbr.rel (0) target = $region9
    $region8: #{tpu_custom_call.1} parent=1 // pred_region
      %s23 = ssub.s32 128, 128
      %24 = vsyncadd [#allocation6], %s23
      %s26 = sshll.u32 [#allocation5], 4
      %s27 = int_to_ptr.vmem [resolvable:$true] %s26
      %29 = dma.hbm_to_vmem [thread:$0]  %s1, 128, %s27, [#allocation6]
    $region9: #{tpu_custom_call.1} parent=1 // pred_fallthru
      _
    // Predicated region
    $region10: #{tpu_custom_call.1} parent=1 // pred_check
      _
    $region11: #{tpu_custom_call.1} parent=1 // pred_check_branch
      %31 = sbr.rel (0) target = $region13
    $region12: #{tpu_custom_call.1} parent=1 // pred_region
      %32 = dma.done [#allocation3], 128
    $region13: #{tpu_custom_call.1} parent=1 // pred_fallthru
      _
    // Predicated region
    $region14: #{tpu_custom_call.1} parent=1 // pred_check
      _
    $region15: #{tpu_custom_call.1} parent=1 // pred_check_branch
      %34 = sbr.rel (0) target = $region17
    $region16: #{tpu_custom_call.1} parent=1 // pred_region
      %35 = dma.done [#allocation6], 128
    $region17: #{tpu_custom_call.1} parent=1 // pred_fallthru
      _
    %v36 = vld [vmem:[#allocation5] sm:$0xff]
    %v37 = vld [vmem:[#allocation2] sm:$0xff]
    %v38 = vadd.f32 %v37, %v36
    %vm39 = vcmask 261120
    %40 = vst.msk [vmem:[#allocation7] sm:$0xff] %vm39, %v38
    %v41 = vld [vmem:[#allocation2] sm:$0xff]
    %43 = vrot.lane.b32.xlu0 %v36, 32
    %v44 = vpop.permute.xlu0 %43
    %v46 = vadd.f32 %v41, %v44
    %vm47 = vcmask 523520
    %48 = vst.msk [vmem:[#allocation7] sm:$0xff] %vm47, %v46
    // Predicated region
    $region18: #{tpu_custom_call.1} parent=1 // pred_check
      _
    $region19: #{tpu_custom_call.1} parent=1 // pred_check_branch
      %50 = sbr.rel (0) target = $region21
    $region20: #{tpu_custom_call.1} parent=1 // pred_region
      %s52 = ssub.s32 128, 128
      %53 = vsyncadd [#allocation4], %s52
      %s55 = sshll.u32 [#allocation7], 4
      %s56 = int_to_ptr.vmem [resolvable:$true] %s55
      %58 = dma.vmem_to_hbm [thread:$0]  %s56, 128, %s2, [#allocation4]
    $region21: #{tpu_custom_call.1} parent=1 // pred_fallthru
      _
    // Predicated region
    $region22: #{tpu_custom_call.1} parent=1 // pred_check
      _
    $region23: #{tpu_custom_call.1} parent=1 // pred_check_branch
      %60 = sbr.rel (0) target = $region25
    $region24: #{tpu_custom_call.1} parent=1 // pred_region
      %61 = dma.done [#allocation4], 128
    $region25: #{tpu_custom_call.1} parent=1 // pred_fallthru
      _
    %62 = vsyncpa [#allocation3], 1
    %63 = vsyncpa [#allocation6], 1
    %64 = vsyncpa [#allocation4], 1

</llo_original>
